<compile_context>
chip_gen: v6e
topology: v6e:2x2x1
jax: 0.10.0
libtpu: 0.0.40
codegen_flags: <defaults>
</compile_context>

<pallas_src>
import functools

import jax
import jax.numpy as jnp
from jax.experimental import pallas as pl
from jax.experimental.pallas import tpu as pltpu


def _round_up(n, m):
    return ((n + m - 1) // m) * m


def _cls0_kernel(x_ref, w1_ref, b1_ref, w2_ref, b2_ref,
                 bott_ref, fc_ref, sm_ref):
    x = x_ref[...]                                           # (TB, in_dim) bf16

    # ---- bottleneck: Linear(in_dim -> bottle_neck_dim), f32 accumulate ----
    y1 = jnp.dot(x, w1_ref[...], preferred_element_type=jnp.float32)
    y1 = y1 + b1_ref[...]                                    # (TB, bottle) f32
    bott_ref[...] = y1.astype(bott_ref.dtype)

    # ---- LeakyReLU(0.2) in f32, then fc: Linear(bottle -> out_dim) ----
    act = jnp.where(y1 > 0, y1, 0.2 * y1).astype(w2_ref.dtype)   # bf16 MXU input
    y2 = jnp.dot(act, w2_ref[...], preferred_element_type=jnp.float32)
    y2 = y2 + b2_ref[...]                                    # (TB, out_dim) f32
    fc_ref[...] = y2.astype(fc_ref.dtype)

    # ---- Softmax(dim=-1), f32 with approx reciprocal on the EUP ----
    m = jnp.max(y2, axis=-1, keepdims=True)
    e = jnp.exp(y2 - m)
    s = jnp.sum(e, axis=-1, keepdims=True)
    sm_ref[...] = (e * pl.reciprocal(s, approx=True)).astype(sm_ref.dtype)


def prepare_cls0_params(w1, b1, w2, b2, compute_dtype=jnp.bfloat16):
    """One-time parameter prep (hoisted out of the per-call path).

    w1: (bottle, in_dim), b1: (bottle,), w2: (out, bottle), b2: (out,)
    -- PyTorch nn.Linear conventions.
    """
    return dict(
        w1_t=jnp.asarray(w1).astype(compute_dtype).T,        # (in_dim, bottle)
        b1=jnp.asarray(b1, jnp.float32)[None, :],             # (1, bottle)
        w2_t=jnp.asarray(w2).astype(compute_dtype).T,        # (bottle, out_dim)
        b2=jnp.asarray(b2, jnp.float32)[None, :],              # (1, out_dim)
    )


@functools.partial(jax.jit, static_argnames=("block_b",))
def cls0_forward(x, params, *, block_b=512):
    """x: (B, in_dim). params: output of prepare_cls0_params.
    Returns [x, bottleneck_out, fc_out, softmax_out] (bottleneck/fc/softmax f32)."""
    w1_t, b1 = params["w1_t"], params["b1"]
    w2_t, b2 = params["w2_t"], params["b2"]

    B, in_dim = x.shape
    bottle = w1_t.shape[1]
    out_dim = w2_t.shape[1]
    compute_dtype = w1_t.dtype

    # Batch tile: multiple of 8 (sublane), capped for VMEM / pipelining.
    tb = max(8, min((block_b // 8) * 8, _round_up(B, 8)))
    b_pad = _round_up(B, tb)

    xf = jnp.asarray(x).astype(compute_dtype)
    if b_pad != B:
        xf = jnp.pad(xf, ((0, b_pad - B), (0, 0)))

    grid = (b_pad // tb,)

    flops = 2 * b_pad * (in_dim * bottle + bottle * out_dim)
    bytes_accessed = (
        xf.size * xf.dtype.itemsize
        + w1_t.size * w1_t.dtype.itemsize
        + w2_t.size * w2_t.dtype.itemsize
        + 4 * (b1.size + b2.size)
        + 4 * b_pad * (bottle + 2 * out_dim)     # bottleneck + fc + softmax stores
    )
    cost = pl.CostEstimate(flops=flops,
                           transcendentals=b_pad * out_dim,
                           bytes_accessed=bytes_accessed)

    bott, fc, sm = pl.pallas_call(
        _cls0_kernel,
        out_shape=(
            jax.ShapeDtypeStruct((b_pad, bottle), jnp.float32),
            jax.ShapeDtypeStruct((b_pad, out_dim), jnp.float32),
            jax.ShapeDtypeStruct((b_pad, out_dim), jnp.float32),
        ),
        grid=grid,
        in_specs=[
            pl.BlockSpec((tb, in_dim), lambda i: (i, 0)),      # x tile per step
            pl.BlockSpec((in_dim, bottle), lambda i: (0, 0)),  # weights pinned
            pl.BlockSpec((1, bottle), lambda i: (0, 0)),
            pl.BlockSpec((bottle, out_dim), lambda i: (0, 0)),
            pl.BlockSpec((1, out_dim), lambda i: (0, 0)),
        ],
        out_specs=(
            pl.BlockSpec((tb, bottle), lambda i: (i, 0)),
            pl.BlockSpec((tb, out_dim), lambda i: (i, 0)),
            pl.BlockSpec((tb, out_dim), lambda i: (i, 0)),
        ),
        compiler_params=pltpu.CompilerParams(
            dimension_semantics=("parallel",)),
        cost_estimate=cost,
    )(xf, w1_t, b1, w2_t, b2)

    if b_pad != B:
        bott, fc, sm = bott[:B], fc[:B], sm[:B]
    return [x, bott, fc, sm]


def _torch_linear_init(key, out_features, in_features):
    # Deterministic init matching nn.Linear's U(-1/sqrt(fan_in), 1/sqrt(fan_in)).
    kw, kb = jax.random.split(key)
    bound = 1.0 / jnp.sqrt(jnp.float32(in_features))
    w = jax.random.uniform(kw, (out_features, in_features), jnp.float32,
                           minval=-bound, maxval=bound)
    b = jax.random.uniform(kb, (out_features,), jnp.float32,
                           minval=-bound, maxval=bound)
    return w, b


if __name__ == "__main__":
    key = jax.random.PRNGKey(0)
    kx, k1, k2 = jax.random.split(key, 3)

    B, in_dim, bottle_neck_dim, out_dim = 8, 32, 256, 16

    x = jax.random.normal(kx, (B, in_dim), jnp.float32)
    w1, b1 = _torch_linear_init(k1, bottle_neck_dim, in_dim)   # bottleneck
    w2, b2 = _torch_linear_init(k2, out_dim, bottle_neck_dim)  # fc

    params = prepare_cls0_params(w1, b1, w2, b2)               # one-time prep
    outs = cls0_forward(x, params)
    for o in outs:
        jax.block_until_ready(o)

    # Sanity checks vs pure-f32 JAX reference (bf16 MXU inputs + approx
    # reciprocal => loose tolerances on the linear outputs).
    y1_ref = x @ w1.T + b1
    y2_ref = jnp.where(y1_ref > 0, y1_ref, 0.2 * y1_ref) @ w2.T + b2
    sm_ref = jax.nn.softmax(y2_ref, axis=-1)

    assert outs[0].shape == x.shape and jnp.allclose(outs[0], x)
    assert jnp.allclose(outs[1], y1_ref, atol=5e-2, rtol=5e-2)
    assert jnp.allclose(outs[2], y2_ref, atol=5e-2, rtol=5e-2)
    assert jnp.allclose(outs[3], sm_ref, atol=2e-2, rtol=5e-2)
    assert jnp.allclose(jnp.sum(outs[3], axis=-1), 1.0, atol=1e-2)

    print("KERNEL_OK")
</pallas_src>

<mosaic_0001>
module attributes {stable_mosaic.version = 11 : i64} {
  func.func @_cls0_kernel(%arg0: i32, %arg1: memref<8x32xbf16, #tpu.memory_space<vmem>>, %arg2: memref<32x256xbf16, #tpu.memory_space<vmem>>, %arg3: memref<1x256xf32, #tpu.memory_space<vmem>>, %arg4: memref<256x16xbf16, #tpu.memory_space<vmem>>, %arg5: memref<1x16xf32, #tpu.memory_space<vmem>>, %arg6: memref<8x256xf32, #tpu.memory_space<vmem>>, %arg7: memref<8x16xf32, #tpu.memory_space<vmem>>, %arg8: memref<8x16xf32, #tpu.memory_space<vmem>>) attributes {dimension_semantics = [#tpu.dimension_semantics<parallel>], iteration_bounds = array<i64: 1>, scalar_prefetch = 0 : i64, scratch_operands = 0 : i64, tpu.core_type = #tpu.core_type<tc>, window_params = [{transform_indices = @transform_0, window_bounds = array<i64: 8, 32>}, {pipeline_mode = #tpu.pipeline_mode<synchronous>, transform_indices = @transform_1, window_bounds = array<i64: 32, 256>}, {pipeline_mode = #tpu.pipeline_mode<synchronous>, transform_indices = @transform_2, window_bounds = array<i64: 1, 256>}, {pipeline_mode = #tpu.pipeline_mode<synchronous>, transform_indices = @transform_3, window_bounds = array<i64: 256, 16>}, {pipeline_mode = #tpu.pipeline_mode<synchronous>, transform_indices = @transform_4, window_bounds = array<i64: 1, 16>}, {transform_indices = @transform_5, window_bounds = array<i64: 8, 256>}, {transform_indices = @transform_6, window_bounds = array<i64: 8, 16>}, {transform_indices = @transform_7, window_bounds = array<i64: 8, 16>}]} {
    %c0 = arith.constant 0 : index
    %c0_0 = arith.constant 0 : index
    %0 = vector.load %arg1[%c0, %c0_0] : memref<8x32xbf16, #tpu.memory_space<vmem>>, vector<8x32xbf16>
    %c0_1 = arith.constant 0 : index
    %c0_2 = arith.constant 0 : index
    %1 = vector.load %arg2[%c0_1, %c0_2] : memref<32x256xbf16, #tpu.memory_space<vmem>>, vector<32x256xbf16>
    %cst = arith.constant dense<0.000000e+00> : vector<8x256xf32>
    %2 = tpu.matmul %0, %1, %cst {dimension_numbers = #tpu.dot_dimension_numbers<[1], [0], [0], [1], [0, 0, 1, 1], [], []>} : vector<8x32xbf16>, vector<32x256xbf16>, vector<8x256xf32> -> vector<8x256xf32>
    %c0_3 = arith.constant 0 : index
    %c0_4 = arith.constant 0 : index
    %3 = vector.load %arg3[%c0_3, %c0_4] : memref<1x256xf32, #tpu.memory_space<vmem>>, vector<1x256xf32>
    %4 = vector.broadcast %3 : vector<1x256xf32> to vector<8x256xf32>
    %5 = arith.addf %2, %4 : vector<8x256xf32>
    %c0_5 = arith.constant 0 : index
    %c0_6 = arith.constant 0 : index
    %6 = vector.load %arg6[%c0_5, %c0_6] : memref<8x256xf32, #tpu.memory_space<vmem>>, vector<8x256xf32>
    tpu.vector_store %arg6[%c0_5, %c0_6], %5 {strides = array<i32>} : memref<8x256xf32, #tpu.memory_space<vmem>>, vector<8x256xf32>,
    %cst_7 = arith.constant 0.000000e+00 : f32
    %7 = vector.broadcast %cst_7 : f32 to vector<8x256xf32>
    %8 = arith.cmpf ogt, %5, %7 : vector<8x256xf32>
    %cst_8 = arith.constant 2.000000e-01 : f32
    %9 = vector.broadcast %cst_8 : f32 to vector<8x256xf32>
    %10 = arith.mulf %9, %5 : vector<8x256xf32>
    %11 = arith.select %8, %5, %10 : vector<8x256xi1>, vector<8x256xf32>
    %12 = arith.truncf %11 : vector<8x256xf32> to vector<8x256xbf16>
    %c0_9 = arith.constant 0 : index
    %c0_10 = arith.constant 0 : index
    %13 = vector.load %arg4[%c0_9, %c0_10] : memref<256x16xbf16, #tpu.memory_space<vmem>>, vector<256x16xbf16>
    %cst_11 = arith.constant dense<0.000000e+00> : vector<8x16xf32>
    %14 = tpu.matmul %12, %13, %cst_11 {dimension_numbers = #tpu.dot_dimension_numbers<[1], [0], [0], [1], [0, 0, 1, 1], [], []>} : vector<8x256xbf16>, vector<256x16xbf16>, vector<8x16xf32> -> vector<8x16xf32>
    %c0_12 = arith.constant 0 : index
    %c0_13 = arith.constant 0 : index
    %15 = vector.load %arg5[%c0_12, %c0_13] : memref<1x16xf32, #tpu.memory_space<vmem>>, vector<1x16xf32>
    %16 = vector.broadcast %15 : vector<1x16xf32> to vector<8x16xf32>
    %17 = arith.addf %14, %16 : vector<8x16xf32>
    %c0_14 = arith.constant 0 : index
    %c0_15 = arith.constant 0 : index
    %18 = vector.load %arg7[%c0_14, %c0_15] : memref<8x16xf32, #tpu.memory_space<vmem>>, vector<8x16xf32>
    tpu.vector_store %arg7[%c0_14, %c0_15], %17 {strides = array<i32>} : memref<8x16xf32, #tpu.memory_space<vmem>>, vector<8x16xf32>,
    %cst_16 = arith.constant dense<0xFF800000> : vector<8xf32>
    %19 = vector.multi_reduction <maximumf>, %17, %cst_16 [1] : vector<8x16xf32> to vector<8xf32>
    %20 = vector.shape_cast %19 : vector<8xf32> to vector<8x1xf32>
    %21 = vector.broadcast %20 : vector<8x1xf32> to vector<8x16xf32>
    %22 = arith.subf %17, %21 : vector<8x16xf32>
    %23 = math.exp %22 : vector<8x16xf32>
    %cst_17 = arith.constant dense<0.000000e+00> : vector<8xf32>
    %24 = vector.multi_reduction <add>, %23, %cst_17 [1] : vector<8x16xf32> to vector<8xf32>
    %25 = vector.shape_cast %24 : vector<8xf32> to vector<8x1xf32>
    %26 = tpu.reciprocal %25 {approx = true} : vector<8x1xf32> -> vector<8x1xf32>
    %27 = vector.broadcast %26 : vector<8x1xf32> to vector<8x16xf32>
    %28 = arith.mulf %23, %27 : vector<8x16xf32>
    %c0_18 = arith.constant 0 : index
    %c0_19 = arith.constant 0 : index
    %29 = vector.load %arg8[%c0_18, %c0_19] : memref<8x16xf32, #tpu.memory_space<vmem>>, vector<8x16xf32>
    tpu.vector_store %arg8[%c0_18, %c0_19], %28 {strides = array<i32>} : memref<8x16xf32, #tpu.memory_space<vmem>>, vector<8x16xf32>,
    return
  }
  func.func @transform_0(%arg0: i32) -> (i32, i32) {
    %c0_i32 = arith.constant 0 : i32
    %c0_i32_0 = arith.constant 0 : i32
    return %arg0, %c0_i32 : i32, i32
  }
  func.func @transform_1(%arg0: i32) -> (i32, i32) {
    %c0_i32 = arith.constant 0 : i32
    %c0_i32_0 = arith.constant 0 : i32
    %c0_i32_1 = arith.constant 0 : i32
    return %c0_i32, %c0_i32_0 : i32, i32
  }
  func.func @transform_2(%arg0: i32) -> (i32, i32) {
    %c0_i32 = arith.constant 0 : i32
    %c0_i32_0 = arith.constant 0 : i32
    %c0_i32_1 = arith.constant 0 : i32
    return %c0_i32, %c0_i32_0 : i32, i32
  }
  func.func @transform_3(%arg0: i32) -> (i32, i32) {
    %c0_i32 = arith.constant 0 : i32
    %c0_i32_0 = arith.constant 0 : i32
    %c0_i32_1 = arith.constant 0 : i32
    return %c0_i32, %c0_i32_0 : i32, i32
  }
  func.func @transform_4(%arg0: i32) -> (i32, i32) {
    %c0_i32 = arith.constant 0 : i32
    %c0_i32_0 = arith.constant 0 : i32
    %c0_i32_1 = arith.constant 0 : i32
    return %c0_i32, %c0_i32_0 : i32, i32
  }
  func.func @transform_5(%arg0: i32) -> (i32, i32) {
    %c0_i32 = arith.constant 0 : i32
    %c0_i32_0 = arith.constant 0 : i32
    return %arg0, %c0_i32 : i32, i32
  }
  func.func @transform_6(%arg0: i32) -> (i32, i32) {
    %c0_i32 = arith.constant 0 : i32
    %c0_i32_0 = arith.constant 0 : i32
    return %arg0, %c0_i32 : i32, i32
  }
  func.func @transform_7(%arg0: i32) -> (i32, i32) {
    %c0_i32 = arith.constant 0 : i32
    %c0_i32_0 = arith.constant 0 : i32
    return %arg0, %c0_i32 : i32, i32
  }
}

</mosaic_0001>

<llo_original>
// kernel: cls0_forward.1
$region0: #{cls0_forward.1}
  #allocation0 [shape = 'u32[]', space=smem, size = 0x4, offset = 0x4, fixed_abs, tag = 'smem constant byte address 0x4 - core index']
  #allocation1 [shape = 'u32[144,128]{1,0:T(1,128)}', space=vmem, size = 0x12000, scoped, tag = 'internal scratch']
  %s0 = inlined_call_operand.vmem [shape: bf16[8,32], index: 0, kind: input, shape index: {}]
  %s1 = inlined_call_operand.vmem [shape: bf16[32,256], index: 1, kind: input, shape index: {}]
  %s2 = inlined_call_operand.vmem [shape: f32[1,256], index: 2, kind: input, shape index: {}]
  %s3 = inlined_call_operand.vmem [shape: bf16[256,16], index: 3, kind: input, shape index: {}]
  %s4 = inlined_call_operand.vmem [shape: f32[1,16], index: 4, kind: input, shape index: {}]
  %s5 = inlined_call_operand.hbm [shape: f32[8,256], index: 5, kind: output, shape index: {0}]
  %s6 = inlined_call_operand.hbm [shape: f32[8,16], index: 6, kind: output, shape index: {1}]
  %s7 = inlined_call_operand.hbm [shape: f32[8,16], index: 7, kind: output, shape index: {2}]
  %8 = xla_tuple %s5, %s6, %s7
  %s9 = sld [smem:[#allocation0]]
  $region46: #{cls0_forward.1} parent=0
    _
  %s11 = ssub.s32 1, %s9
  %s12 = scalar_select 0, %s11, %s9
  $region1: #{cls0_forward.1} parent=0
    #allocation2 [shape = 'u8[8192]{0}', space=vmem, size = 0x2000, scoped, tag = 'output window, operand 0, single buffered']
    #allocation3 [shape = 's32[1]{0}', space=sflag, size = 0x4, scoped, tag = 'scoped memory for cls0_forward.1']
    #allocation4 [shape = 'u8[4096]{0}', space=vmem, size = 0x1000, scoped, tag = 'output window, operand 1, single buffered']
    #allocation5 [shape = 's32[1]{0}', space=sflag, size = 0x4, scoped, tag = 'scoped memory for cls0_forward.1']
    #allocation6 [shape = 'u8[4096]{0}', space=vmem, size = 0x1000, scoped, tag = 'output window, operand 2, single buffered']
    %13 = vsyncpa [#allocation3], 0
    %14 = vsyncpa [#allocation5], 0
    // Predicated region
    $region2: #{cls0_forward.1} parent=1 // pred_check
      _
    $region3: #{cls0_forward.1} parent=1 // pred_check_branch
      %16 = sbr.rel (0) target = $region5
    $region4: #{cls0_forward.1} parent=1 // pred_region
      _
    $region5: #{cls0_forward.1} parent=1 // pred_fallthru
      _
    // Predicated region
    $region6: #{cls0_forward.1} parent=1 // pred_check
      _
    $region7: #{cls0_forward.1} parent=1 // pred_check_branch
      %18 = sbr.rel (0) target = $region9
    $region8: #{cls0_forward.1} parent=1 // pred_region
      _
    $region9: #{cls0_forward.1} parent=1 // pred_fallthru
      _
    // Predicated region
    $region10: #{cls0_forward.1} parent=1 // pred_check
      _
    $region11: #{cls0_forward.1} parent=1 // pred_check_branch
      %20 = sbr.rel (0) target = $region13
    $region12: #{cls0_forward.1} parent=1 // pred_region
      _
    $region13: #{cls0_forward.1} parent=1 // pred_fallthru
      _
    // Predicated region
    $region14: #{cls0_forward.1} parent=1 // pred_check
      _
    $region15: #{cls0_forward.1} parent=1 // pred_check_branch
      %22 = sbr.rel (0) target = $region17
    $region16: #{cls0_forward.1} parent=1 // pred_region
      _
    $region17: #{cls0_forward.1} parent=1 // pred_fallthru
      _
    // Predicated region
    $region18: #{cls0_forward.1} parent=1 // pred_check
      _
    $region19: #{cls0_forward.1} parent=1 // pred_check_branch
      %24 = sbr.rel (0) target = $region21
    $region20: #{cls0_forward.1} parent=1 // pred_region
      _
    $region21: #{cls0_forward.1} parent=1 // pred_fallthru
      _
    %v26 = vld [vmem:[%s0] sm:$0xf]
    %v27 = vld [vmem:[%s1] sm:$0xff]
    %v28 = vld [vmem:[%s1 + $0x8] sm:$0xff]
    %v29 = vld [vmem:[%s1 + $0x10] sm:$0xff]
    %v30 = vld [vmem:[%s1 + $0x18] sm:$0xff]
    %v31 = vld [vmem:[%s2] sm:$0x3]
    %v33 = vlaneseq
    %v34 = vshrl.u32 %v33, 7
    %v35 = vsub.s32 0, %v34
    %v36 = vrot.slane %v31, %v35
    %v37 = vlaneseq
    %v38 = vshrl.u32 %v37, 7
    %v39 = vsub.s32 1, %v38
    %v40 = vrot.slane %v31, %v39
    %v47 = vunpack.c.l.b16 %v27
    %v48 = vunpack.c.h.b16 %v27
    %v49 = vunpack.c.l.b16 %v28
    %v50 = vunpack.c.h.b16 %v28
    %v51 = vunpack.c.l.b16 %v29
    %v52 = vunpack.c.h.b16 %v29
    %v53 = vunpack.c.l.b16 %v30
    %v54 = vunpack.c.h.b16 %v30
    %v55 = vpack.c.b16 %v49, %v47
    %v56 = vpack.c.b16 %v50, %v48
    %v57 = vpack.c.b16 %v53, %v51
    %v58 = vpack.c.b16 %v54, %v52
    %vm63 = vcmask 261120
    %v65 = vsel %vm63, %v26, 0
    %67 = vmatprep.subr.bf16.mxu0 0
    %68 = vmatpush1.bf16.msra.mxu0 0
    %69 = vmatprep.subr.bf16.mxu0 0
    %70 = vmatpush1.bf16.msra.mxu0 0
    %71 = vmatprep.subr.bf16.mxu0 0
    %72 = vmatpush1.bf16.msra.mxu0 0
    %73 = vmatprep.subr.bf16.mxu0 0
    %74 = vmatpush1.bf16.msra.mxu0 0
    %75 = vmatprep.subr.bf16.mxu0 0
    %76 = vmatpush1.bf16.msra.mxu0 0
    %77 = vmatprep.subr.bf16.mxu0 0
    %78 = vmatpush1.bf16.msra.mxu0 0
    %79 = vmatprep.subr.bf16.mxu0 %v58
    %80 = vmatpush1.bf16.msra.mxu0 %v57
    %81 = vmatprep.subr.bf16.mxu0 %v56
    %82 = vmatpush1.bf16.msra.mxu0 %v55
    %83 = vmatprep.subr.bf16.mxu0 0
    %84 = vmatpush2.bf16.msra.mxu0 0
    %85 = vmatprep.subr.bf16.mxu0 0
    %86 = vmatpush2.bf16.msra.mxu0 0
    %87 = vmatprep.subr.bf16.mxu0 0
    %88 = vmatpush2.bf16.msra.mxu0 0
    %89 = vmatprep.subr.bf16.mxu0 0
    %90 = vmatpush2.bf16.msra.mxu0 0
    %91 = vmatprep.subr.bf16.mxu0 0
    %92 = vmatpush2.bf16.msra.mxu0 0
    %93 = vmatprep.subr.bf16.mxu0 0
    %94 = vmatpush2.bf16.msra.mxu0 0
    %95 = vmatprep.subr.bf16.mxu0 0
    %96 = vmatpush2.bf16.msra.mxu0 0
    %97 = vmatprep.subr.bf16.mxu0 0
    %98 = vmatpush2.bf16.msra.mxu0 0
    %99 = vmatprep.mubr.bf16.mxu0 0
    %100 = vmatmul.mubr.bf16.gmra.mxu0 %v65
    %v101 = vpop.f32.mrf.mxu0
    %v102 = vadd.f32 %v36, %v101
    %v103 = vpop.f32.mrf.mxu0
    %v104 = vadd.f32 %v40, %v103
    %v105 = vpop.f32.mrf.mxu0
    %v106 = vpop.f32.mrf.mxu0
    %107 = vdwg.mxu0
    %108 = vst [vmem:[#allocation2] sm:$0xff] %v102
    %109 = vst [vmem:[#allocation2 + $0x8] sm:$0xff] %v104
    %vm110 = vcmp.gt.f32.partialorder %v102, 0.0
    %vm111 = vcmp.gt.f32.partialorder %v104, 0.0
    %v112 = vmul.f32 %v102, 0.2
    %v113 = vmul.f32 %v104, 0.2
    %v114 = vsel %vm110, %v102, %v112
    %v115 = vsel %vm111, %v104, %v113
    %v116 = vpack.c.bf16 %v114, %v114
    %v117 = vpack.c.bf16 %v115, %v115
    %v118 = vld [vmem:[%s3] sm:$0xf]
    %v119 = vld [vmem:[%s3 + $0x4] sm:$0xf]
    %v120 = vld [vmem:[%s3 + $0x8] sm:$0xf]
    %v121 = vld [vmem:[%s3 + $0xc] sm:$0xf]
    %v122 = vld [vmem:[%s3 + $0x10] sm:$0xf]
    %v123 = vld [vmem:[%s3 + $0x14] sm:$0xf]
    %v124 = vld [vmem:[%s3 + $0x18] sm:$0xf]
    %v125 = vld [vmem:[%s3 + $0x1c] sm:$0xf]
    %v126 = vld [vmem:[%s3 + $0x20] sm:$0xf]
    %v127 = vld [vmem:[%s3 + $0x24] sm:$0xf]
    %v128 = vld [vmem:[%s3 + $0x28] sm:$0xf]
    %v129 = vld [vmem:[%s3 + $0x2c] sm:$0xf]
    %v130 = vld [vmem:[%s3 + $0x30] sm:$0xf]
    %v131 = vld [vmem:[%s3 + $0x34] sm:$0xf]
    %v132 = vld [vmem:[%s3 + $0x38] sm:$0xf]
    %v133 = vld [vmem:[%s3 + $0x3c] sm:$0xf]
    %v134 = vld [vmem:[%s3 + $0x40] sm:$0xf]
    %v135 = vld [vmem:[%s3 + $0x44] sm:$0xf]
    %v136 = vld [vmem:[%s3 + $0x48] sm:$0xf]
    %v137 = vld [vmem:[%s3 + $0x4c] sm:$0xf]
    %v138 = vld [vmem:[%s3 + $0x50] sm:$0xf]
    %v139 = vld [vmem:[%s3 + $0x54] sm:$0xf]
    %v140 = vld [vmem:[%s3 + $0x58] sm:$0xf]
    %v141 = vld [vmem:[%s3 + $0x5c] sm:$0xf]
    %v142 = vld [vmem:[%s3 + $0x60] sm:$0xf]
    %v143 = vld [vmem:[%s3 + $0x64] sm:$0xf]
    %v144 = vld [vmem:[%s3 + $0x68] sm:$0xf]
    %v145 = vld [vmem:[%s3 + $0x6c] sm:$0xf]
    %v146 = vld [vmem:[%s3 + $0x70] sm:$0xf]
    %v147 = vld [vmem:[%s3 + $0x74] sm:$0xf]
    %v148 = vld [vmem:[%s3 + $0x78] sm:$0xf]
    %v149 = vld [vmem:[%s3 + $0x7c] sm:$0xf]
    %v150 = vld [vmem:[%s4] sm:$0x1]
    %v152 = vlaneseq
    %v153 = vshrl.u32 %v152, 7
    %v154 = vsub.s32 0, %v153
    %v155 = vrot.slane %v150, %v154
    %v189 = vunpack.c.l.b16 %v118
    %v190 = vunpack.c.l.b16 %v119
    %v191 = vunpack.c.l.b16 %v120
    %v192 = vunpack.c.l.b16 %v121
    %v193 = vunpack.c.l.b16 %v122
    %v194 = vunpack.c.l.b16 %v123
    %v195 = vunpack.c.l.b16 %v124
    %v196 = vunpack.c.l.b16 %v125
    %v197 = vunpack.c.l.b16 %v126
    %v198 = vunpack.c.l.b16 %v127
    %v199 = vunpack.c.l.b16 %v128
    %v200 = vunpack.c.l.b16 %v129
    %v201 = vunpack.c.l.b16 %v130
    %v202 = vunpack.c.l.b16 %v131
    %v203 = vunpack.c.l.b16 %v132
    %v204 = vunpack.c.l.b16 %v133
    %v205 = vunpack.c.l.b16 %v134
    %v206 = vunpack.c.l.b16 %v135
    %v207 = vunpack.c.l.b16 %v136
    %v208 = vunpack.c.l.b16 %v137
    %v209 = vunpack.c.l.b16 %v138
    %v210 = vunpack.c.l.b16 %v139
    %v211 = vunpack.c.l.b16 %v140
    %v212 = vunpack.c.l.b16 %v141
    %v213 = vunpack.c.l.b16 %v142
    %v214 = vunpack.c.l.b16 %v143
    %v215 = vunpack.c.l.b16 %v144
    %v216 = vunpack.c.l.b16 %v145
    %v217 = vunpack.c.l.b16 %v146
    %v218 = vunpack.c.l.b16 %v147
    %v219 = vunpack.c.l.b16 %v148
    %v220 = vunpack.c.l.b16 %v149
    %v221 = vpack.c.b16 %v190, %v189
    %v222 = vpack.c.b16 %v192, %v191
    %v223 = vpack.c.b16 %v194, %v193
    %v224 = vpack.c.b16 %v196, %v195
    %v225 = vpack.c.b16 %v198, %v197
    %v226 = vpack.c.b16 %v200, %v199
    %v227 = vpack.c.b16 %v202, %v201
    %v228 = vpack.c.b16 %v204, %v203
    %v229 = vpack.c.b16 %v206, %v205
    %v230 = vpack.c.b16 %v208, %v207
    %v231 = vpack.c.b16 %v210, %v209
    %v232 = vpack.c.b16 %v212, %v211
    %v233 = vpack.c.b16 %v214, %v213
    %v234 = vpack.c.b16 %v216, %v215
    %v235 = vpack.c.b16 %v218, %v217
    %v236 = vpack.c.b16 %v220, %v219
    %253 = vmatprep.subr.bf16.mxu0 0
    %254 = vmatpush1.bf16.msra.mxu0 %v228
    %255 = vmatprep.subr.bf16.mxu0 0
    %256 = vmatpush1.bf16.msra.mxu0 %v227
    %257 = vmatprep.subr.bf16.mxu0 0
    %258 = vmatpush1.bf16.msra.mxu0 %v226
    %259 = vmatprep.subr.bf16.mxu0 0
    %260 = vmatpush1.bf16.msra.mxu0 %v225
    %261 = vmatprep.subr.bf16.mxu0 0
    %262 = vmatpush1.bf16.msra.mxu0 %v224
    %263 = vmatprep.subr.bf16.mxu0 0
    %264 = vmatpush1.bf16.msra.mxu0 %v223
    %265 = vmatprep.subr.bf16.mxu0 0
    %266 = vmatpush1.bf16.msra.mxu0 %v222
    %267 = vmatprep.subr.bf16.mxu0 0
    %268 = vmatpush1.bf16.msra.mxu0 %v221
    %269 = vmatprep.subr.bf16.mxu0 0
    %270 = vmatpush2.bf16.msra.mxu0 %v236
    %271 = vmatprep.subr.bf16.mxu0 0
    %272 = vmatpush2.bf16.msra.mxu0 %v235
    %273 = vmatprep.subr.bf16.mxu0 0
    %274 = vmatpush2.bf16.msra.mxu0 %v234
    %275 = vmatprep.subr.bf16.mxu0 0
    %276 = vmatpush2.bf16.msra.mxu0 %v233
    %277 = vmatprep.subr.bf16.mxu0 0
    %278 = vmatpush2.bf16.msra.mxu0 %v232
    %279 = vmatprep.subr.bf16.mxu0 0
    %280 = vmatpush2.bf16.msra.mxu0 %v231
    %281 = vmatprep.subr.bf16.mxu0 0
    %282 = vmatpush2.bf16.msra.mxu0 %v230
    %283 = vmatprep.subr.bf16.mxu0 0
    %284 = vmatpush2.bf16.msra.mxu0 %v229
    %285 = vmatprep.mubr.bf16.mxu0 %v117
    %286 = vmatmul.mubr.bf16.gmra.mxu0 %v116
    %v287 = vpop.f32.mrf.mxu0
    %v288 = vadd.f32 %v155, %v287
    %v289 = vpop.f32.mrf.mxu0
    %v290 = vpop.f32.mrf.mxu0
    %v291 = vpop.f32.mrf.mxu0
    %292 = vdwg.mxu0
    %vm293 = vcmask 130048
    %294 = vst.msk [vmem:[#allocation4] sm:$0xff] %vm293, %v288
    %v295 = vsel %vm293, %v288, -inf
    %296 = vmax.xlane.f32.xlu0 %v295
    %v297 = vpop.xlane.xlu0 %296
    %v298 = vsub.f32 %v288, %v297
    %v299 = vmul.f32 %v298, 1.442695
    %v300 = vpow.pop %v299
    %v301 = vsel %vm293, %v300, 0.0
    %302 = vadd.xlane.f32.xlu0 %v301
    %v303 = vpop.xlane.xlu0 %302
    %v304 = vrcp.pop %v303
    %v305 = vmul.f32 %v300, %v304
    %306 = vst.msk [vmem:[#allocation6] sm:$0xff] %vm293, %v305
    // Predicated region
    $region22: #{cls0_forward.1} parent=1 // pred_check
      _
    $region23: #{cls0_forward.1} parent=1 // pred_check_branch
      %308 = sbr.rel (0) target = $region25
    $region24: #{cls0_forward.1} parent=1 // pred_region
      %s310 = ssub.s32 256, 256
      %311 = vsyncadd [#allocation3], %s310
      %s313 = sshll.u32 [#allocation2], 4
      %s314 = int_to_ptr.vmem [resolvable:$true] %s313
      %316 = dma.vmem_to_hbm [thread:$0]  %s314, 256, %s5, [#allocation3]
    $region25: #{cls0_forward.1} parent=1 // pred_fallthru
      _
    // Predicated region
    $region26: #{cls0_forward.1} parent=1 // pred_check
      _
    $region27: #{cls0_forward.1} parent=1 // pred_check_branch
      %318 = sbr.rel (0) target = $region29
    $region28: #{cls0_forward.1} parent=1 // pred_region
      %s320 = ssub.s32 128, 128
      %321 = vsyncadd [#allocation5], %s320
      %s323 = sshll.u32 [#allocation4], 4
      %s324 = int_to_ptr.vmem [resolvable:$true] %s323
      %326 = dma.vmem_to_hbm [thread:$0]  %s324, 128, %s6, [#allocation5]
    $region29: #{cls0_forward.1} parent=1 // pred_fallthru
      _
    // Predicated region
    $region30: #{cls0_forward.1} parent=1 // pred_check
      _
    $region31: #{cls0_forward.1} parent=1 // pred_check_branch
      %328 = sbr.rel (0) target = $region33
    $region32: #{cls0_forward.1} parent=1 // pred_region
      %s330 = ssub.s32 128, 128
      %331 = vsyncadd [#allocation5], %s330
      %s333 = sshll.u32 [#allocation6], 4
      %s334 = int_to_ptr.vmem [resolvable:$true] %s333
      %336 = dma.vmem_to_hbm [thread:$0]  %s334, 128, %s7, [#allocation5]
    $region33: #{cls0_forward.1} parent=1 // pred_fallthru
      _
    // Predicated region
    $region34: #{cls0_forward.1} parent=1 // pred_check
      _
    $region35: #{cls0_forward.1} parent=1 // pred_check_branch
      %338 = sbr.rel (0) target = $region37
    $region36: #{cls0_forward.1} parent=1 // pred_region
      %339 = dma.done [#allocation3], 256
    $region37: #{cls0_forward.1} parent=1 // pred_fallthru
      _
    // Predicated region
    $region38: #{cls0_forward.1} parent=1 // pred_check
      _
    $region39: #{cls0_forward.1} parent=1 // pred_check_branch
      %341 = sbr.rel (0) target = $region41
    $region40: #{cls0_forward.1} parent=1 // pred_region
      %342 = dma.done [#allocation5], 128
    $region41: #{cls0_forward.1} parent=1 // pred_fallthru
      _
    // Predicated region
    $region42: #{cls0_forward.1} parent=1 // pred_check
      _
    $region43: #{cls0_forward.1} parent=1 // pred_check_branch
      %344 = sbr.rel (0) target = $region45
    $region44: #{cls0_forward.1} parent=1 // pred_region
      %345 = dma.done [#allocation5], 128
    $region45: #{cls0_forward.1} parent=1 // pred_fallthru
      _
    %346 = vsyncpa [#allocation3], 1
    %347 = vsyncpa [#allocation5], 1

</llo_original>
